<compile_context>
chip_gen: v7x
topology: tpu7x:2x2x1
jax: 0.10.0
libtpu: 0.0.40
codegen_flags: <defaults>
</compile_context>

<pallas_src>
import functools
import numpy as np
import jax
import jax.numpy as jnp
from jax.experimental import pallas as pl
from jax.experimental.pallas import tpu as pltpu


# ------------------------------------------------------------------ budgets / tiling ---

def _vmem_capacity_bytes():
    """Physical VMEM per TensorCore; conservative fallback if the query is unavailable."""
    try:
        return int(pltpu.get_tpu_info().vmem_capacity_bytes)
    except Exception:
        return 64 * 1024 * 1024          # v7x-class worst case


def _budgets():
    cap = _vmem_capacity_bytes()
    if cap >= 100 * 1024 * 1024:         # v4 / v5e / v6e: 128 MiB physical VMEM
        return dict(tile_bytes=4 * 1024 * 1024,
                    vmem_limit=64 * 1024 * 1024,
                    fused_chunk=48 * 1024 * 1024)
    return dict(tile_bytes=2 * 1024 * 1024,   # v7x-class: 64 MiB physical VMEM
                vmem_limit=32 * 1024 * 1024,
                fused_chunk=20 * 1024 * 1024)


def _pick_tile(l, r, itemsize, max_tile_bytes):
    """Largest lane tile that is a multiple of 128, divides l, and fits the budget."""
    cap = max(128, (max_tile_bytes // (itemsize * max(r, 1))) // 128 * 128)
    best = 0
    t = 128
    limit = min(l, cap)
    while t <= limit:
        if l % t == 0:
            best = t
        t += 128
    if best:
        return best
    # l < 128 or not 128-divisible: fall back to the full extent (allowed by the
    # "block equals full dim" rule).  Such small slabs normally take the fused path.
    # TODO(synk): lane-pad shapes that are both huge and not 128-divisible.
    return l


def _round_up(v, m):
    return (v + m - 1) // m * m


# --------------------------------------------------------------- fused (VMEM-resident) -

def _fused_kernel(x_hbm, g_ref, b_ref, y_hbm, buf, s_sc, m2_sc, sem,
                  *, schedule, eps, hw):
    """Chunk-resident path: per domain chunk, DMA the whole (cnt, C, HW) slab into VMEM,
    compute exact (two-pass) per-channel mean/var, normalize in place, DMA back.
    HBM traffic: read x once + write y once (vs. 3x for the streaming path)."""
    # TODO(synk): ping-pong double-buffering would additionally overlap chunk k's
    # writeback with chunk k+1's load at the cost of 2x scratch; kept single-buffered so
    # larger chunks still qualify for this path.
    for in_start, out_start, cnt, ci in schedule:           # static Python schedule
        inv_n = 1.0 / float(cnt * hw)

        cp_in = pltpu.make_async_copy(x_hbm.at[pl.ds(in_start, cnt)],
                                      buf.at[pl.ds(0, cnt)], sem)
        cp_in.start()
        cp_in.wait()

        s_sc[...] = jnp.zeros_like(s_sc)

        @pl.loop(0, cnt)
        def _(j):
            xr = buf[j].astype(jnp.float32)                  # (C, HW)
            s_sc[...] += jnp.sum(xr, axis=-1, keepdims=True)

        mean = s_sc[...] * inv_n                             # (C, 1)
        m2_sc[...] = jnp.zeros_like(m2_sc)

        @pl.loop(0, cnt)
        def _(j):
            d = buf[j].astype(jnp.float32) - mean
            m2_sc[...] += jnp.sum(d * d, axis=-1, keepdims=True)

        var = m2_sc[...] * inv_n                             # biased (1/N) variance
        a = g_ref[ci].astype(jnp.float32) * jax.lax.rsqrt(var + eps)
        b = b_ref[ci].astype(jnp.float32) - mean * a

        @pl.loop(0, cnt)
        def _(j):
            buf[j] = (buf[j].astype(jnp.float32) * a + b).astype(buf.dtype)

        cp_out = pltpu.make_async_copy(buf.at[pl.ds(0, cnt)],
                                       y_hbm.at[pl.ds(out_start, cnt)], sem)
        cp_out.start()
        cp_out.wait()


# ------------------------------------------------------------- streaming two-pass path -

def _stats_kernel(rows_ref, x_ref, sum_ref, ssq_ref):
    """Pass 1: per-output-row partial (sum, sumsq) over the lane axis, accumulated across
    the spatial-tile grid axis into the row-indexed output block (row axis is parallel)."""
    t = pl.program_id(1)
    x = x_ref[0].astype(jnp.float32)                         # (R, tile)
    ps = jnp.sum(x, axis=-1, keepdims=True)                  # (R, 1), f32 accumulation
    pss = jnp.sum(x * x, axis=-1, keepdims=True)

    @pl.when(t == 0)
    def _():
        sum_ref[0] = ps
        ssq_ref[0] = pss

    @pl.when(t > 0)
    def _():
        sum_ref[0] = sum_ref[0] + ps
        ssq_ref[0] = ssq_ref[0] + pss


def _norm_kernel(rows_ref, chunks_ref, x_ref, scale_ref, shift_ref, o_ref):
    """Pass 2: y = x * scale + shift (one FMA per element), lane-dense output tile."""
    x = x_ref[0].astype(jnp.float32)                         # (R, tile)
    o_ref[0] = (x * scale_ref[0] + shift_ref[0]).astype(o_ref.dtype)


# ----------------------------------------------------------------------------- wrapper -

def multibn_forward(x, domain, gammas, betas, *, eps=1e-5, batch_size=16,
                    requires_grad=False, force_two_pass=False):
    """JAX/Pallas equivalent of MultiBN.forward(x, domain) (dim=2, training-mode stats).

    x:       (N, C, H, W)  NCHW, like the PyTorch module
    domain:  (N,) int domain label per sample (concrete at trace time, like torch.unique)
    gammas:  (num_domain, C) per-domain BN weight
    betas:   (num_domain, C) per-domain BN bias
    Returns (concatenated output, domain).
    """
    N, C, H, W = x.shape
    HW = H * W
    itemsize = x.dtype.itemsize
    eps = float(eps)
    budgets = _budgets()

    # ---- host-side schedule (domain must be concrete; new compositions retrace) ----
    dom_np = np.asarray(domain)
    uniq, counts = np.unique(dom_np, return_counts=True)     # sorted, like torch.unique
    bs = int(batch_size) if requires_grad else 1

    chunk_list = []                 # (input row start, output row start, rows, domain id)
    rows, chunks = [], []
    out_pos = 0
    for idx, d in enumerate(uniq):
        cnt = int(counts[idx])
        start = idx * bs                                      # module's slicing rule
        take = max(0, min(cnt, N - start))                    # torch slicing clamps at N
        if take == 0:
            continue
        ci = len(chunk_list)
        chunk_list.append((start, out_pos, take, int(d)))
        rows.extend(range(start, start + take))
        chunks.extend([ci] * take)
        out_pos += take
    n_out, n_chunks = out_pos, len(chunk_list)
    if n_out == 0:
        return jnp.zeros((0, C, H, W), x.dtype), domain

    gam32 = jnp.asarray(gammas, jnp.float32)
    bet32 = jnp.asarray(betas, jnp.float32)
    sub = max(1, 32 // itemsize)          # native sublane count for this dtype

    # ---- fused chunk-resident path: read x once + write y once (2x HBM traffic) ----
    max_take = max(t for _, _, t, _ in chunk_list)
    padded_chunk = max_take * _round_up(C, sub) * _round_up(HW, 128) * itemsize
    if (not force_two_pass) and padded_chunk <= budgets["fused_chunk"]:
        x3 = x.reshape(N, C, HW)                              # free contiguous reshape
        dom_ids = np.asarray([d for *_, d in chunk_list])
        ga = gam32[dom_ids].reshape(n_chunks, C, 1)
        bb = bet32[dom_ids].reshape(n_chunks, C, 1)
        schedule = tuple((s, o, t, i) for i, (s, o, t, _) in enumerate(chunk_list))
        y3 = pl.pallas_call(
            functools.partial(_fused_kernel, schedule=schedule, eps=eps, hw=HW),
            out_shape=jax.ShapeDtypeStruct((n_out, C, HW), x.dtype),
            in_specs=[pl.BlockSpec(memory_space=pl.ANY),
                      pl.BlockSpec(memory_space=pltpu.MemorySpace.VMEM),
                      pl.BlockSpec(memory_space=pltpu.MemorySpace.VMEM)],
            out_specs=pl.BlockSpec(memory_space=pl.ANY),
            scratch_shapes=[pltpu.VMEM((max_take, C, HW), x.dtype),
                            pltpu.VMEM((C, 1), jnp.float32),
                            pltpu.VMEM((C, 1), jnp.float32),
                            pltpu.SemaphoreType.DMA],
            compiler_params=pltpu.CompilerParams(
                vmem_limit_bytes=budgets["vmem_limit"]),
        )(x3, ga, bb)
        return y3.reshape(n_out, C, H, W), domain

    # ---- streaming two-pass path (chunks too large for VMEM) ----
    # Sublane packing: view each (C, HW) slab as (R, L) with all sublanes used when C is
    # below the native sublane count; the kernels below are packing-agnostic.
    if C < sub and sub % C == 0 and HW % (sub // C) == 0:
        rep = sub // C
    else:
        rep = 1
    R, L = C * rep, HW // rep

    tile = _pick_tile(L, R, itemsize, budgets["tile_bytes"])
    assert L % tile == 0
    n_tiles = L // tile

    x3 = x.reshape(N, R, L)                                   # free contiguous reshape
    rows_a = jnp.asarray(rows, jnp.int32)
    chunks_a = jnp.asarray(chunks, jnp.int32)
    vmem_limit = budgets["vmem_limit"]

    # Pass 1: per-output-row partial sums.  Row axis "parallel" (v7x megacore-shardable),
    # tile axis "arbitrary" (carried accumulation into the row-indexed output block).
    row_sum, row_ssq = pl.pallas_call(
        _stats_kernel,
        out_shape=(jax.ShapeDtypeStruct((n_out, R, 1), jnp.float32),
                   jax.ShapeDtypeStruct((n_out, R, 1), jnp.float32)),
        grid_spec=pltpu.PrefetchScalarGridSpec(
            num_scalar_prefetch=1,
            grid=(n_out, n_tiles),
            in_specs=[pl.BlockSpec((1, R, tile), lambda i, t, rws: (rws[i], 0, t))],
            out_specs=(pl.BlockSpec((1, R, 1), lambda i, t, rws: (i, 0, 0)),
                       pl.BlockSpec((1, R, 1), lambda i, t, rws: (i, 0, 0)))),
        compiler_params=pltpu.CompilerParams(
            dimension_semantics=("parallel", "arbitrary"),
            vmem_limit_bytes=vmem_limit),
    )(rows_a, x3)

    # Tiny per-chunk combine in plain JAX (a few KB): fold packed sublane rows back to
    # channels, then a per-row-centered (Chan) variance combine (better conditioned than
    # a global E[x^2]-E[x]^2) and fold mean/var/gamma/beta into per-channel scale/shift.
    rs = row_sum[..., 0].reshape(n_out, C, rep).sum(axis=-1)  # (n_out, C)
    rq = row_ssq[..., 0].reshape(n_out, C, rep).sum(axis=-1)
    hw_f = float(HW)
    m_rc = rs / hw_f
    m2_rc = jnp.maximum(rq - rs * m_rc, 0.0)
    scales, shifts = [], []
    for _, out_start, take, d in chunk_list:
        sl = slice(out_start, out_start + take)
        n_tot = float(take) * hw_f
        mean = rs[sl].sum(axis=0) / n_tot                     # (C,)
        dm = m_rc[sl] - mean[None, :]
        var = (m2_rc[sl].sum(axis=0) + hw_f * jnp.sum(dm * dm, axis=0)) / n_tot
        var = jnp.maximum(var, 0.0)                           # biased variance >= 0
        a = gam32[d] * jax.lax.rsqrt(var + eps)
        scales.append(a)
        shifts.append(bet32[d] - mean * a)
    scale = jnp.stack(scales)[:, :, None]                     # (n_chunks, C, 1)
    shift = jnp.stack(shifts)[:, :, None]
    if rep > 1:                                               # expand to packed rows
        scale = jnp.repeat(scale, rep, axis=1)
        shift = jnp.repeat(shift, rep, axis=1)

    # Pass 2: y = x * scale + shift.  No carried state -> both grid axes "parallel"
    # (rows outer), so the normalize pass also shards across v7x's two TensorCores.
    y3 = pl.pallas_call(
        _norm_kernel,
        out_shape=jax.ShapeDtypeStruct((n_out, R, L), x.dtype),
        grid_spec=pltpu.PrefetchScalarGridSpec(
            num_scalar_prefetch=2,
            grid=(n_out, n_tiles),
            in_specs=[
                pl.BlockSpec((1, R, tile), lambda i, t, rws, chks: (rws[i], 0, t)),
                pl.BlockSpec((1, R, 1), lambda i, t, rws, chks: (chks[i], 0, 0)),
                pl.BlockSpec((1, R, 1), lambda i, t, rws, chks: (chks[i], 0, 0)),
            ],
            out_specs=pl.BlockSpec((1, R, tile), lambda i, t, rws, chks: (i, 0, t))),
        compiler_params=pltpu.CompilerParams(
            dimension_semantics=("parallel", "parallel"),
            vmem_limit_bytes=vmem_limit),
    )(rows_a, chunks_a, x3, scale, shift)

    return y3.reshape(n_out, C, H, W), domain


# --------------------------------------------------------------------------- reference -

def _reference(x, domain, gammas, betas, eps, bs):
    """Pure numpy reference reproducing the PyTorch forward (training-mode BN)."""
    xn = np.asarray(x, dtype=np.float32)
    gn = np.asarray(gammas, dtype=np.float32)
    bn = np.asarray(betas, dtype=np.float32)
    uniq, counts = np.unique(np.asarray(domain), return_counts=True)
    outs = []
    for idx, d in enumerate(uniq):
        cnt = int(counts[idx])
        chunk = xn[idx * bs: idx * bs + cnt]
        if chunk.shape[0] == 0:
            continue
        mean = chunk.mean(axis=(0, 2, 3), keepdims=True)
        var = chunk.var(axis=(0, 2, 3), keepdims=True)        # biased
        y = (chunk - mean) / np.sqrt(var + eps)
        y = y * gn[int(d)].reshape(1, -1, 1, 1) + bn[int(d)].reshape(1, -1, 1, 1)
        outs.append(y)
    return np.concatenate(outs, axis=0)


if __name__ == "__main__":
    num_domain = 10
    eps = 1e-5

    def run_case(key, N, C, H, W, domain_list):
        ka, kb, kc = jax.random.split(key, 3)
        x = jax.random.normal(ka, (N, C, H, W), dtype=jnp.float32)
        gammas = 1.0 + 0.1 * jax.random.normal(kb, (num_domain, C), dtype=jnp.float32)
        betas = 0.1 * jax.random.normal(kc, (num_domain, C), dtype=jnp.float32)
        domain = jnp.asarray(domain_list, dtype=jnp.int32)
        ref = _reference(x, domain, gammas, betas, eps, bs=1)
        # exercise both the fused chunk-resident path and the streaming two-pass path
        for force_two_pass in (False, True):
            out, _ = multibn_forward(x, domain, gammas, betas, eps=eps,
                                     batch_size=16, requires_grad=False,
                                     force_two_pass=force_two_pass)
            out = jax.block_until_ready(out)
            np.testing.assert_allclose(np.asarray(out), ref, rtol=1e-4, atol=1e-4)

    root = jax.random.PRNGKey(0)
    k0, k1 = jax.random.split(root, 2)
    # main case: fused path + sublane-packed (C=4 < 8) streaming path
    run_case(k0, 8, 4, 16, 16, [0, 0, 0, 0, 1, 1, 2, 2])
    # small / irregular case: unpacked streaming fallback (C=5, HW=64 < 128 lanes)
    run_case(k1, 4, 5, 8, 8, [1, 1, 2, 2])
    print("KERNEL_OK")
</pallas_src>

<mosaic_0001>
module attributes {stable_mosaic.version = 11 : i64} {
  func.func @_fused_kernel(%arg0: memref<8x4x256xf32, #tpu.memory_space<any>>, %arg1: memref<3x4x1xf32, #tpu.memory_space<vmem>>, %arg2: memref<3x4x1xf32, #tpu.memory_space<vmem>>, %arg3: memref<8x4x256xf32, #tpu.memory_space<any>>, %arg4: memref<4x4x256xf32, #tpu.memory_space<vmem>>, %arg5: memref<4x1xf32, #tpu.memory_space<vmem>>, %arg6: memref<4x1xf32, #tpu.memory_space<vmem>>, %arg7: memref<!tpu.dma_semaphore, #tpu.memory_space<semaphore_mem>>) attributes {dimension_semantics = [], scalar_prefetch = 0 : i64, scratch_operands = 4 : i64, tpu.core_type = #tpu.core_type<tc>} {
    %c0_i32 = arith.constant 0 : i32
    %c0_i32_0 = arith.constant 0 : i32
    %c0_i32_1 = arith.constant 0 : i32
    %0 = tpu.memref_slice %arg0[%c0_i32, %c0_i32_0, %c0_i32_1] : memref<8x4x256xf32, #tpu.memory_space<any>> -> memref<4x4x256xf32, #tpu.memory_space<any>>
    %c0_i32_2 = arith.constant 0 : i32
    %c0_i32_3 = arith.constant 0 : i32
    %c0_i32_4 = arith.constant 0 : i32
    %1 = tpu.memref_slice %arg4[%c0_i32_2, %c0_i32_3, %c0_i32_4] : memref<4x4x256xf32, #tpu.memory_space<vmem>> -> memref<4x4x256xf32, #tpu.memory_space<vmem>>
    tpu.enqueue_dma source(%0 : memref<4x4x256xf32, #tpu.memory_space<any>>) target(%1 : memref<4x4x256xf32, #tpu.memory_space<vmem>>) target_semaphore(%arg7 : memref<!tpu.dma_semaphore, #tpu.memory_space<semaphore_mem>>)
    %c0_i32_5 = arith.constant 0 : i32
    %c0_i32_6 = arith.constant 0 : i32
    %c0_i32_7 = arith.constant 0 : i32
    %2 = tpu.memref_slice %arg0[%c0_i32_5, %c0_i32_6, %c0_i32_7] : memref<8x4x256xf32, #tpu.memory_space<any>> -> memref<4x4x256xf32, #tpu.memory_space<any>>
    %c0_i32_8 = arith.constant 0 : i32
    %c0_i32_9 = arith.constant 0 : i32
    %c0_i32_10 = arith.constant 0 : i32
    %3 = tpu.memref_slice %arg4[%c0_i32_8, %c0_i32_9, %c0_i32_10] : memref<4x4x256xf32, #tpu.memory_space<vmem>> -> memref<4x4x256xf32, #tpu.memory_space<vmem>>
    tpu.wait_dma2 semaphore(%arg7 : memref<!tpu.dma_semaphore, #tpu.memory_space<semaphore_mem>>) src(%2 : memref<4x4x256xf32, #tpu.memory_space<any>>) dst(%3 : memref<4x4x256xf32, #tpu.memory_space<vmem>>)
    %cst = arith.constant 0.000000e+00 : f32
    %4 = vector.broadcast %cst : f32 to vector<4x1xf32>
    %c0 = arith.constant 0 : index
    %c0_11 = arith.constant 0 : index
    %5 = vector.load %arg5[%c0, %c0_11] : memref<4x1xf32, #tpu.memory_space<vmem>>, vector<4x1xf32>
    tpu.vector_store %arg5[%c0, %c0_11], %4 {strides = array<i32>} : memref<4x1xf32, #tpu.memory_space<vmem>>, vector<4x1xf32>,
    %c0_i32_12 = arith.constant 0 : i32
    %c4_i32 = arith.constant 4 : i32
    %6 = arith.addi %c0_i32_12, %c4_i32 : i32
    %c1_i32 = arith.constant 1 : i32
    scf.for %arg8 = %c0_i32_12 to %6 step %c1_i32  : i32 {
      %c1_i32_156 = arith.constant 1 : i32
      %93 = arith.muli %arg8, %c1_i32_156 : i32
      %c0_i32_157 = arith.constant 0 : i32
      %94 = arith.addi %c0_i32_157, %93 : i32
      %95 = arith.index_cast %94 : i32 to index
      %c0_158 = arith.constant 0 : index
      %c0_159 = arith.constant 0 : index
      %96 = vector.load %arg4[%95, %c0_158, %c0_159] : memref<4x4x256xf32, #tpu.memory_space<vmem>>, vector<1x4x256xf32>
      %97 = vector.shape_cast %96 : vector<1x4x256xf32> to vector<4x256xf32>
      %c0_160 = arith.constant 0 : index
      %c0_161 = arith.constant 0 : index
      %98 = vector.load %arg5[%c0_160, %c0_161] : memref<4x1xf32, #tpu.memory_space<vmem>>, vector<4x1xf32>
      %cst_162 = arith.constant dense<0.000000e+00> : vector<4xf32>
      %99 = vector.multi_reduction <add>, %97, %cst_162 [1] : vector<4x256xf32> to vector<4xf32>
      %100 = vector.shape_cast %99 : vector<4xf32> to vector<4x1xf32>
      %101 = arith.addf %98, %100 : vector<4x1xf32>
      %c0_163 = arith.constant 0 : index
      %c0_164 = arith.constant 0 : index
      %102 = vector.load %arg5[%c0_163, %c0_164] : memref<4x1xf32, #tpu.memory_space<vmem>>, vector<4x1xf32>
      tpu.vector_store %arg5[%c0_163, %c0_164], %101 {strides = array<i32>} : memref<4x1xf32, #tpu.memory_space<vmem>>, vector<4x1xf32>,
    }
    %c4_i32_13 = arith.constant 4 : i32
    %c0_14 = arith.constant 0 : index
    %c0_15 = arith.constant 0 : index
    %7 = vector.load %arg5[%c0_14, %c0_15] : memref<4x1xf32, #tpu.memory_space<vmem>>, vector<4x1xf32>
    %cst_16 = arith.constant 9.765625E-4 : f32
    %8 = vector.broadcast %cst_16 : f32 to vector<4x1xf32>
    %9 = arith.mulf %7, %8 : vector<4x1xf32>
    %cst_17 = arith.constant 0.000000e+00 : f32
    %10 = vector.broadcast %cst_17 : f32 to vector<4x1xf32>
    %c0_18 = arith.constant 0 : index
    %c0_19 = arith.constant 0 : index
    %11 = vector.load %arg6[%c0_18, %c0_19] : memref<4x1xf32, #tpu.memory_space<vmem>>, vector<4x1xf32>
    tpu.vector_store %arg6[%c0_18, %c0_19], %10 {strides = array<i32>} : memref<4x1xf32, #tpu.memory_space<vmem>>, vector<4x1xf32>,
    %c0_i32_20 = arith.constant 0 : i32
    %c4_i32_21 = arith.constant 4 : i32
    %12 = arith.addi %c0_i32_20, %c4_i32_21 : i32
    %c1_i32_22 = arith.constant 1 : i32
    scf.for %arg8 = %c0_i32_20 to %12 step %c1_i32_22  : i32 {
      %c1_i32_156 = arith.constant 1 : i32
      %93 = arith.muli %arg8, %c1_i32_156 : i32
      %c0_i32_157 = arith.constant 0 : i32
      %94 = arith.addi %c0_i32_157, %93 : i32
      %95 = arith.index_cast %94 : i32 to index
      %c0_158 = arith.constant 0 : index
      %c0_159 = arith.constant 0 : index
      %96 = vector.load %arg4[%95, %c0_158, %c0_159] : memref<4x4x256xf32, #tpu.memory_space<vmem>>, vector<1x4x256xf32>
      %97 = vector.shape_cast %96 : vector<1x4x256xf32> to vector<4x256xf32>
      %98 = vector.broadcast %9 : vector<4x1xf32> to vector<4x256xf32>
      %99 = arith.subf %97, %98 : vector<4x256xf32>
      %c0_160 = arith.constant 0 : index
      %c0_161 = arith.constant 0 : index
      %100 = vector.load %arg6[%c0_160, %c0_161] : memref<4x1xf32, #tpu.memory_space<vmem>>, vector<4x1xf32>
      %101 = arith.mulf %99, %99 : vector<4x256xf32>
      %cst_162 = arith.constant dense<0.000000e+00> : vector<4xf32>
      %102 = vector.multi_reduction <add>, %101, %cst_162 [1] : vector<4x256xf32> to vector<4xf32>
      %103 = vector.shape_cast %102 : vector<4xf32> to vector<4x1xf32>
      %104 = arith.addf %100, %103 : vector<4x1xf32>
      %c0_163 = arith.constant 0 : index
      %c0_164 = arith.constant 0 : index
      %105 = vector.load %arg6[%c0_163, %c0_164] : memref<4x1xf32, #tpu.memory_space<vmem>>, vector<4x1xf32>
      tpu.vector_store %arg6[%c0_163, %c0_164], %104 {strides = array<i32>} : memref<4x1xf32, #tpu.memory_space<vmem>>, vector<4x1xf32>,
    }
    %c4_i32_23 = arith.constant 4 : i32
    %c0_24 = arith.constant 0 : index
    %c0_25 = arith.constant 0 : index
    %13 = vector.load %arg6[%c0_24, %c0_25] : memref<4x1xf32, #tpu.memory_space<vmem>>, vector<4x1xf32>
    %cst_26 = arith.constant 9.765625E-4 : f32
    %14 = vector.broadcast %cst_26 : f32 to vector<4x1xf32>
    %15 = arith.mulf %13, %14 : vector<4x1xf32>
    %c0_27 = arith.constant 0 : index
    %c0_28 = arith.constant 0 : index
    %c0_29 = arith.constant 0 : index
    %16 = vector.load %arg1[%c0_27, %c0_28, %c0_29] : memref<3x4x1xf32, #tpu.memory_space<vmem>>, vector<1x4x1xf32>
    %17 = vector.shape_cast %16 : vector<1x4x1xf32> to vector<4x1xf32>
    %cst_30 = arith.constant 9.99999974E-6 : f32
    %18 = vector.broadcast %cst_30 : f32 to vector<4x1xf32>
    %19 = arith.addf %15, %18 : vector<4x1xf32>
    %20 = math.rsqrt %19 : vector<4x1xf32>
    %21 = arith.mulf %17, %20 : vector<4x1xf32>
    %c0_31 = arith.constant 0 : index
    %c0_32 = arith.constant 0 : index
    %c0_33 = arith.constant 0 : index
    %22 = vector.load %arg2[%c0_31, %c0_32, %c0_33] : memref<3x4x1xf32, #tpu.memory_space<vmem>>, vector<1x4x1xf32>
    %23 = vector.shape_cast %22 : vector<1x4x1xf32> to vector<4x1xf32>
    %24 = arith.mulf %9, %21 : vector<4x1xf32>
    %25 = arith.subf %23, %24 : vector<4x1xf32>
    %c0_i32_34 = arith.constant 0 : i32
    %c4_i32_35 = arith.constant 4 : i32
    %26 = arith.addi %c0_i32_34, %c4_i32_35 : i32
    %c1_i32_36 = arith.constant 1 : i32
    scf.for %arg8 = %c0_i32_34 to %26 step %c1_i32_36  : i32 {
      %c1_i32_156 = arith.constant 1 : i32
      %93 = arith.muli %arg8, %c1_i32_156 : i32
      %c0_i32_157 = arith.constant 0 : i32
      %94 = arith.addi %c0_i32_157, %93 : i32
      %95 = arith.index_cast %94 : i32 to index
      %c0_158 = arith.constant 0 : index
      %c0_159 = arith.constant 0 : index
      %96 = vector.load %arg4[%95, %c0_158, %c0_159] : memref<4x4x256xf32, #tpu.memory_space<vmem>>, vector<1x4x256xf32>
      %97 = vector.shape_cast %96 : vector<1x4x256xf32> to vector<4x256xf32>
      %98 = vector.broadcast %21 : vector<4x1xf32> to vector<4x256xf32>
      %99 = arith.mulf %97, %98 : vector<4x256xf32>
      %100 = vector.broadcast %25 : vector<4x1xf32> to vector<4x256xf32>
      %101 = arith.addf %99, %100 : vector<4x256xf32>
      %102 = arith.index_cast %94 : i32 to index
      %c0_160 = arith.constant 0 : index
      %c0_161 = arith.constant 0 : index
      %103 = vector.load %arg4[%102, %c0_160, %c0_161] : memref<4x4x256xf32, #tpu.memory_space<vmem>>, vector<1x4x256xf32>
      %104 = vector.shape_cast %103 : vector<1x4x256xf32> to vector<4x256xf32>
      %105 = vector.shape_cast %101 : vector<4x256xf32> to vector<1x4x256xf32>
      tpu.vector_store %arg4[%102, %c0_160, %c0_161], %105 {strides = array<i32>} : memref<4x4x256xf32, #tpu.memory_space<vmem>>, vector<1x4x256xf32>,
    }
    %c4_i32_37 = arith.constant 4 : i32
    %c0_i32_38 = arith.constant 0 : i32
    %c0_i32_39 = arith.constant 0 : i32
    %c0_i32_40 = arith.constant 0 : i32
    %27 = tpu.memref_slice %arg4[%c0_i32_38, %c0_i32_39, %c0_i32_40] : memref<4x4x256xf32, #tpu.memory_space<vmem>> -> memref<4x4x256xf32, #tpu.memory_space<vmem>>
    %c0_i32_41 = arith.constant 0 : i32
    %c0_i32_42 = arith.constant 0 : i32
    %c0_i32_43 = arith.constant 0 : i32
    %28 = tpu.memref_slice %arg3[%c0_i32_41, %c0_i32_42, %c0_i32_43] : memref<8x4x256xf32, #tpu.memory_space<any>> -> memref<4x4x256xf32, #tpu.memory_space<any>>
    tpu.enqueue_dma source(%27 : memref<4x4x256xf32, #tpu.memory_space<vmem>>) target(%28 : memref<4x4x256xf32, #tpu.memory_space<any>>) target_semaphore(%arg7 : memref<!tpu.dma_semaphore, #tpu.memory_space<semaphore_mem>>)
    %c0_i32_44 = arith.constant 0 : i32
    %c0_i32_45 = arith.constant 0 : i32
    %c0_i32_46 = arith.constant 0 : i32
    %29 = tpu.memref_slice %arg4[%c0_i32_44, %c0_i32_45, %c0_i32_46] : memref<4x4x256xf32, #tpu.memory_space<vmem>> -> memref<4x4x256xf32, #tpu.memory_space<vmem>>
    %c0_i32_47 = arith.constant 0 : i32
    %c0_i32_48 = arith.constant 0 : i32
    %c0_i32_49 = arith.constant 0 : i32
    %30 = tpu.memref_slice %arg3[%c0_i32_47, %c0_i32_48, %c0_i32_49] : memref<8x4x256xf32, #tpu.memory_space<any>> -> memref<4x4x256xf32, #tpu.memory_space<any>>
    tpu.wait_dma2 semaphore(%arg7 : memref<!tpu.dma_semaphore, #tpu.memory_space<semaphore_mem>>) src(%29 : memref<4x4x256xf32, #tpu.memory_space<vmem>>) dst(%30 : memref<4x4x256xf32, #tpu.memory_space<any>>)
    %c1_i32_50 = arith.constant 1 : i32
    %c0_i32_51 = arith.constant 0 : i32
    %c0_i32_52 = arith.constant 0 : i32
    %31 = tpu.memref_slice %arg0[%c1_i32_50, %c0_i32_51, %c0_i32_52] : memref<8x4x256xf32, #tpu.memory_space<any>> -> memref<2x4x256xf32, #tpu.memory_space<any>>
    %c0_i32_53 = arith.constant 0 : i32
    %c0_i32_54 = arith.constant 0 : i32
    %c0_i32_55 = arith.constant 0 : i32
    %32 = tpu.memref_slice %arg4[%c0_i32_53, %c0_i32_54, %c0_i32_55] : memref<4x4x256xf32, #tpu.memory_space<vmem>> -> memref<2x4x256xf32, #tpu.memory_space<vmem>>
    tpu.enqueue_dma source(%31 : memref<2x4x256xf32, #tpu.memory_space<any>>) target(%32 : memref<2x4x256xf32, #tpu.memory_space<vmem>>) target_semaphore(%arg7 : memref<!tpu.dma_semaphore, #tpu.memory_space<semaphore_mem>>)
    %c1_i32_56 = arith.constant 1 : i32
    %c0_i32_57 = arith.constant 0 : i32
    %c0_i32_58 = arith.constant 0 : i32
    %33 = tpu.memref_slice %arg0[%c1_i32_56, %c0_i32_57, %c0_i32_58] : memref<8x4x256xf32, #tpu.memory_space<any>> -> memref<2x4x256xf32, #tpu.memory_space<any>>
    %c0_i32_59 = arith.constant 0 : i32
    %c0_i32_60 = arith.constant 0 : i32
    %c0_i32_61 = arith.constant 0 : i32
    %34 = tpu.memref_slice %arg4[%c0_i32_59, %c0_i32_60, %c0_i32_61] : memref<4x4x256xf32, #tpu.memory_space<vmem>> -> memref<2x4x256xf32, #tpu.memory_space<vmem>>
    tpu.wait_dma2 semaphore(%arg7 : memref<!tpu.dma_semaphore, #tpu.memory_space<semaphore_mem>>) src(%33 : memref<2x4x256xf32, #tpu.memory_space<any>>) dst(%34 : memref<2x4x256xf32, #tpu.memory_space<vmem>>)
    %cst_62 = arith.constant 0.000000e+00 : f32
    %35 = vector.broadcast %cst_62 : f32 to vector<4x1xf32>
    %c0_63 = arith.constant 0 : index
    %c0_64 = arith.constant 0 : index
    %36 = vector.load %arg5[%c0_63, %c0_64] : memref<4x1xf32, #tpu.memory_space<vmem>>, vector<4x1xf32>
    tpu.vector_store %arg5[%c0_63, %c0_64], %35 {strides = array<i32>} : memref<4x1xf32, #tpu.memory_space<vmem>>, vector<4x1xf32>,
    %c0_i32_65 = arith.constant 0 : i32
    %c2_i32 = arith.constant 2 : i32
    %37 = arith.addi %c0_i32_65, %c2_i32 : i32
    %c1_i32_66 = arith.constant 1 : i32
    scf.for %arg8 = %c0_i32_65 to %37 step %c1_i32_66  : i32 {
      %c1_i32_156 = arith.constant 1 : i32
      %93 = arith.muli %arg8, %c1_i32_156 : i32
      %c0_i32_157 = arith.constant 0 : i32
      %94 = arith.addi %c0_i32_157, %93 : i32
      %95 = arith.index_cast %94 : i32 to index
      %c0_158 = arith.constant 0 : index
      %c0_159 = arith.constant 0 : index
      %96 = vector.load %arg4[%95, %c0_158, %c0_159] : memref<4x4x256xf32, #tpu.memory_space<vmem>>, vector<1x4x256xf32>
      %97 = vector.shape_cast %96 : vector<1x4x256xf32> to vector<4x256xf32>
      %c0_160 = arith.constant 0 : index
      %c0_161 = arith.constant 0 : index
      %98 = vector.load %arg5[%c0_160, %c0_161] : memref<4x1xf32, #tpu.memory_space<vmem>>, vector<4x1xf32>
      %cst_162 = arith.constant dense<0.000000e+00> : vector<4xf32>
      %99 = vector.multi_reduction <add>, %97, %cst_162 [1] : vector<4x256xf32> to vector<4xf32>
      %100 = vector.shape_cast %99 : vector<4xf32> to vector<4x1xf32>
      %101 = arith.addf %98, %100 : vector<4x1xf32>
      %c0_163 = arith.constant 0 : index
      %c0_164 = arith.constant 0 : index
      %102 = vector.load %arg5[%c0_163, %c0_164] : memref<4x1xf32, #tpu.memory_space<vmem>>, vector<4x1xf32>
      tpu.vector_store %arg5[%c0_163, %c0_164], %101 {strides = array<i32>} : memref<4x1xf32, #tpu.memory_space<vmem>>, vector<4x1xf32>,
    }
    %c2_i32_67 = arith.constant 2 : i32
    %c0_68 = arith.constant 0 : index
    %c0_69 = arith.constant 0 : index
    %38 = vector.load %arg5[%c0_68, %c0_69] : memref<4x1xf32, #tpu.memory_space<vmem>>, vector<4x1xf32>
    %cst_70 = arith.constant 0.001953125 : f32
    %39 = vector.broadcast %cst_70 : f32 to vector<4x1xf32>
    %40 = arith.mulf %38, %39 : vector<4x1xf32>
    %cst_71 = arith.constant 0.000000e+00 : f32
    %41 = vector.broadcast %cst_71 : f32 to vector<4x1xf32>
    %c0_72 = arith.constant 0 : index
    %c0_73 = arith.constant 0 : index
    %42 = vector.load %arg6[%c0_72, %c0_73] : memref<4x1xf32, #tpu.memory_space<vmem>>, vector<4x1xf32>
    tpu.vector_store %arg6[%c0_72, %c0_73], %41 {strides = array<i32>} : memref<4x1xf32, #tpu.memory_space<vmem>>, vector<4x1xf32>,
    %c0_i32_74 = arith.constant 0 : i32
    %c2_i32_75 = arith.constant 2 : i32
    %43 = arith.addi %c0_i32_74, %c2_i32_75 : i32
    %c1_i32_76 = arith.constant 1 : i32
    scf.for %arg8 = %c0_i32_74 to %43 step %c1_i32_76  : i32 {
      %c1_i32_156 = arith.constant 1 : i32
      %93 = arith.muli %arg8, %c1_i32_156 : i32
      %c0_i32_157 = arith.constant 0 : i32
      %94 = arith.addi %c0_i32_157, %93 : i32
      %95 = arith.index_cast %94 : i32 to index
      %c0_158 = arith.constant 0 : index
      %c0_159 = arith.constant 0 : index
      %96 = vector.load %arg4[%95, %c0_158, %c0_159] : memref<4x4x256xf32, #tpu.memory_space<vmem>>, vector<1x4x256xf32>
      %97 = vector.shape_cast %96 : vector<1x4x256xf32> to vector<4x256xf32>
      %98 = vector.broadcast %40 : vector<4x1xf32> to vector<4x256xf32>
      %99 = arith.subf %97, %98 : vector<4x256xf32>
      %c0_160 = arith.constant 0 : index
      %c0_161 = arith.constant 0 : index
      %100 = vector.load %arg6[%c0_160, %c0_161] : memref<4x1xf32, #tpu.memory_space<vmem>>, vector<4x1xf32>
      %101 = arith.mulf %99, %99 : vector<4x256xf32>
      %cst_162 = arith.constant dense<0.000000e+00> : vector<4xf32>
      %102 = vector.multi_reduction <add>, %101, %cst_162 [1] : vector<4x256xf32> to vector<4xf32>
      %103 = vector.shape_cast %102 : vector<4xf32> to vector<4x1xf32>
      %104 = arith.addf %100, %103 : vector<4x1xf32>
      %c0_163 = arith.constant 0 : index
      %c0_164 = arith.constant 0 : index
      %105 = vector.load %arg6[%c0_163, %c0_164] : memref<4x1xf32, #tpu.memory_space<vmem>>, vector<4x1xf32>
      tpu.vector_store %arg6[%c0_163, %c0_164], %104 {strides = array<i32>} : memref<4x1xf32, #tpu.memory_space<vmem>>, vector<4x1xf32>,
    }
    %c2_i32_77 = arith.constant 2 : i32
    %c0_78 = arith.constant 0 : index
    %c0_79 = arith.constant 0 : index
    %44 = vector.load %arg6[%c0_78, %c0_79] : memref<4x1xf32, #tpu.memory_space<vmem>>, vector<4x1xf32>
    %cst_80 = arith.constant 0.001953125 : f32
    %45 = vector.broadcast %cst_80 : f32 to vector<4x1xf32>
    %46 = arith.mulf %44, %45 : vector<4x1xf32>
    %c1 = arith.constant 1 : index
    %c0_81 = arith.constant 0 : index
    %c0_82 = arith.constant 0 : index
    %47 = vector.load %arg1[%c1, %c0_81, %c0_82] : memref<3x4x1xf32, #tpu.memory_space<vmem>>, vector<1x4x1xf32>
    %48 = vector.shape_cast %47 : vector<1x4x1xf32> to vector<4x1xf32>
    %cst_83 = arith.constant 9.99999974E-6 : f32
    %49 = vector.broadcast %cst_83 : f32 to vector<4x1xf32>
    %50 = arith.addf %46, %49 : vector<4x1xf32>
    %51 = math.rsqrt %50 : vector<4x1xf32>
    %52 = arith.mulf %48, %51 : vector<4x1xf32>
    %c1_84 = arith.constant 1 : index
    %c0_85 = arith.constant 0 : index
    %c0_86 = arith.constant 0 : index
    %53 = vector.load %arg2[%c1_84, %c0_85, %c0_86] : memref<3x4x1xf32, #tpu.memory_space<vmem>>, vector<1x4x1xf32>
    %54 = vector.shape_cast %53 : vector<1x4x1xf32> to vector<4x1xf32>
    %55 = arith.mulf %40, %52 : vector<4x1xf32>
    %56 = arith.subf %54, %55 : vector<4x1xf32>
    %c0_i32_87 = arith.constant 0 : i32
    %c2_i32_88 = arith.constant 2 : i32
    %57 = arith.addi %c0_i32_87, %c2_i32_88 : i32
    %c1_i32_89 = arith.constant 1 : i32
    scf.for %arg8 = %c0_i32_87 to %57 step %c1_i32_89  : i32 {
      %c1_i32_156 = arith.constant 1 : i32
      %93 = arith.muli %arg8, %c1_i32_156 : i32
      %c0_i32_157 = arith.constant 0 : i32
      %94 = arith.addi %c0_i32_157, %93 : i32
      %95 = arith.index_cast %94 : i32 to index
      %c0_158 = arith.constant 0 : index
      %c0_159 = arith.constant 0 : index
      %96 = vector.load %arg4[%95, %c0_158, %c0_159] : memref<4x4x256xf32, #tpu.memory_space<vmem>>, vector<1x4x256xf32>
      %97 = vector.shape_cast %96 : vector<1x4x256xf32> to vector<4x256xf32>
      %98 = vector.broadcast %52 : vector<4x1xf32> to vector<4x256xf32>
      %99 = arith.mulf %97, %98 : vector<4x256xf32>
      %100 = vector.broadcast %56 : vector<4x1xf32> to vector<4x256xf32>
      %101 = arith.addf %99, %100 : vector<4x256xf32>
      %102 = arith.index_cast %94 : i32 to index
      %c0_160 = arith.constant 0 : index
      %c0_161 = arith.constant 0 : index
      %103 = vector.load %arg4[%102, %c0_160, %c0_161] : memref<4x4x256xf32, #tpu.memory_space<vmem>>, vector<1x4x256xf32>
      %104 = vector.shape_cast %103 : vector<1x4x256xf32> to vector<4x256xf32>
      %105 = vector.shape_cast %101 : vector<4x256xf32> to vector<1x4x256xf32>
      tpu.vector_store %arg4[%102, %c0_160, %c0_161], %105 {strides = array<i32>} : memref<4x4x256xf32, #tpu.memory_space<vmem>>, vector<1x4x256xf32>,
    }
    %c2_i32_90 = arith.constant 2 : i32
    %c0_i32_91 = arith.constant 0 : i32
    %c0_i32_92 = arith.constant 0 : i32
    %c0_i32_93 = arith.constant 0 : i32
    %58 = tpu.memref_slice %arg4[%c0_i32_91, %c0_i32_92, %c0_i32_93] : memref<4x4x256xf32, #tpu.memory_space<vmem>> -> memref<2x4x256xf32, #tpu.memory_space<vmem>>
    %c4_i32_94 = arith.constant 4 : i32
    %c0_i32_95 = arith.constant 0 : i32
    %c0_i32_96 = arith.constant 0 : i32
    %59 = tpu.memref_slice %arg3[%c4_i32_94, %c0_i32_95, %c0_i32_96] : memref<8x4x256xf32, #tpu.memory_space<any>> -> memref<2x4x256xf32, #tpu.memory_space<any>>
    tpu.enqueue_dma source(%58 : memref<2x4x256xf32, #tpu.memory_space<vmem>>) target(%59 : memref<2x4x256xf32, #tpu.memory_space<any>>) target_semaphore(%arg7 : memref<!tpu.dma_semaphore, #tpu.memory_space<semaphore_mem>>)
    %c0_i32_97 = arith.constant 0 : i32
    %c0_i32_98 = arith.constant 0 : i32
    %c0_i32_99 = arith.constant 0 : i32
    %60 = tpu.memref_slice %arg4[%c0_i32_97, %c0_i32_98, %c0_i32_99] : memref<4x4x256xf32, #tpu.memory_space<vmem>> -> memref<2x4x256xf32, #tpu.memory_space<vmem>>
    %c4_i32_100 = arith.constant 4 : i32
    %c0_i32_101 = arith.constant 0 : i32
    %c0_i32_102 = arith.constant 0 : i32
    %61 = tpu.memref_slice %arg3[%c4_i32_100, %c0_i32_101, %c0_i32_102] : memref<8x4x256xf32, #tpu.memory_space<any>> -> memref<2x4x256xf32, #tpu.memory_space<any>>
    tpu.wait_dma2 semaphore(%arg7 : memref<!tpu.dma_semaphore, #tpu.memory_space<semaphore_mem>>) src(%60 : memref<2x4x256xf32, #tpu.memory_space<vmem>>) dst(%61 : memref<2x4x256xf32, #tpu.memory_space<any>>)
    %c2_i32_103 = arith.constant 2 : i32
    %c0_i32_104 = arith.constant 0 : i32
    %c0_i32_105 = arith.constant 0 : i32
    %62 = tpu.memref_slice %arg0[%c2_i32_103, %c0_i32_104, %c0_i32_105] : memref<8x4x256xf32, #tpu.memory_space<any>> -> memref<2x4x256xf32, #tpu.memory_space<any>>
    %c0_i32_106 = arith.constant 0 : i32
    %c0_i32_107 = arith.constant 0 : i32
    %c0_i32_108 = arith.constant 0 : i32
    %63 = tpu.memref_slice %arg4[%c0_i32_106, %c0_i32_107, %c0_i32_108] : memref<4x4x256xf32, #tpu.memory_space<vmem>> -> memref<2x4x256xf32, #tpu.memory_space<vmem>>
    tpu.enqueue_dma source(%62 : memref<2x4x256xf32, #tpu.memory_space<any>>) target(%63 : memref<2x4x256xf32, #tpu.memory_space<vmem>>) target_semaphore(%arg7 : memref<!tpu.dma_semaphore, #tpu.memory_space<semaphore_mem>>)
    %c2_i32_109 = arith.constant 2 : i32
    %c0_i32_110 = arith.constant 0 : i32
    %c0_i32_111 = arith.constant 0 : i32
    %64 = tpu.memref_slice %arg0[%c2_i32_109, %c0_i32_110, %c0_i32_111] : memref<8x4x256xf32, #tpu.memory_space<any>> -> memref<2x4x256xf32, #tpu.memory_space<any>>
    %c0_i32_112 = arith.constant 0 : i32
    %c0_i32_113 = arith.constant 0 : i32
    %c0_i32_114 = arith.constant 0 : i32
    %65 = tpu.memref_slice %arg4[%c0_i32_112, %c0_i32_113, %c0_i32_114] : memref<4x4x256xf32, #tpu.memory_space<vmem>> -> memref<2x4x256xf32, #tpu.memory_space<vmem>>
    tpu.wait_dma2 semaphore(%arg7 : memref<!tpu.dma_semaphore, #tpu.memory_space<semaphore_mem>>) src(%64 : memref<2x4x256xf32, #tpu.memory_space<any>>) dst(%65 : memref<2x4x256xf32, #tpu.memory_space<vmem>>)
    %cst_115 = arith.constant 0.000000e+00 : f32
    %66 = vector.broadcast %cst_115 : f32 to vector<4x1xf32>
    %c0_116 = arith.constant 0 : index
    %c0_117 = arith.constant 0 : index
    %67 = vector.load %arg5[%c0_116, %c0_117] : memref<4x1xf32, #tpu.memory_space<vmem>>, vector<4x1xf32>
    tpu.vector_store %arg5[%c0_116, %c0_117], %66 {strides = array<i32>} : memref<4x1xf32, #tpu.memory_space<vmem>>, vector<4x1xf32>,
    %c0_i32_118 = arith.constant 0 : i32
    %c2_i32_119 = arith.constant 2 : i32
    %68 = arith.addi %c0_i32_118, %c2_i32_119 : i32
    %c1_i32_120 = arith.constant 1 : i32
    scf.for %arg8 = %c0_i32_118 to %68 step %c1_i32_120  : i32 {
      %c1_i32_156 = arith.constant 1 : i32
      %93 = arith.muli %arg8, %c1_i32_156 : i32
      %c0_i32_157 = arith.constant 0 : i32
      %94 = arith.addi %c0_i32_157, %93 : i32
      %95 = arith.index_cast %94 : i32 to index
      %c0_158 = arith.constant 0 : index
      %c0_159 = arith.constant 0 : index
      %96 = vector.load %arg4[%95, %c0_158, %c0_159] : memref<4x4x256xf32, #tpu.memory_space<vmem>>, vector<1x4x256xf32>
      %97 = vector.shape_cast %96 : vector<1x4x256xf32> to vector<4x256xf32>
      %c0_160 = arith.constant 0 : index
      %c0_161 = arith.constant 0 : index
      %98 = vector.load %arg5[%c0_160, %c0_161] : memref<4x1xf32, #tpu.memory_space<vmem>>, vector<4x1xf32>
      %cst_162 = arith.constant dense<0.000000e+00> : vector<4xf32>
      %99 = vector.multi_reduction <add>, %97, %cst_162 [1] : vector<4x256xf32> to vector<4xf32>
      %100 = vector.shape_cast %99 : vector<4xf32> to vector<4x1xf32>
      %101 = arith.addf %98, %100 : vector<4x1xf32>
      %c0_163 = arith.constant 0 : index
      %c0_164 = arith.constant 0 : index
      %102 = vector.load %arg5[%c0_163, %c0_164] : memref<4x1xf32, #tpu.memory_space<vmem>>, vector<4x1xf32>
      tpu.vector_store %arg5[%c0_163, %c0_164], %101 {strides = array<i32>} : memref<4x1xf32, #tpu.memory_space<vmem>>, vector<4x1xf32>,
    }
    %c2_i32_121 = arith.constant 2 : i32
    %c0_122 = arith.constant 0 : index
    %c0_123 = arith.constant 0 : index
    %69 = vector.load %arg5[%c0_122, %c0_123] : memref<4x1xf32, #tpu.memory_space<vmem>>, vector<4x1xf32>
    %cst_124 = arith.constant 0.001953125 : f32
    %70 = vector.broadcast %cst_124 : f32 to vector<4x1xf32>
    %71 = arith.mulf %69, %70 : vector<4x1xf32>
    %cst_125 = arith.constant 0.000000e+00 : f32
    %72 = vector.broadcast %cst_125 : f32 to vector<4x1xf32>
    %c0_126 = arith.constant 0 : index
    %c0_127 = arith.constant 0 : index
    %73 = vector.load %arg6[%c0_126, %c0_127] : memref<4x1xf32, #tpu.memory_space<vmem>>, vector<4x1xf32>
    tpu.vector_store %arg6[%c0_126, %c0_127], %72 {strides = array<i32>} : memref<4x1xf32, #tpu.memory_space<vmem>>, vector<4x1xf32>,
    %c0_i32_128 = arith.constant 0 : i32
    %c2_i32_129 = arith.constant 2 : i32
    %74 = arith.addi %c0_i32_128, %c2_i32_129 : i32
    %c1_i32_130 = arith.constant 1 : i32
    scf.for %arg8 = %c0_i32_128 to %74 step %c1_i32_130  : i32 {
      %c1_i32_156 = arith.constant 1 : i32
      %93 = arith.muli %arg8, %c1_i32_156 : i32
      %c0_i32_157 = arith.constant 0 : i32
      %94 = arith.addi %c0_i32_157, %93 : i32
      %95 = arith.index_cast %94 : i32 to index
      %c0_158 = arith.constant 0 : index
      %c0_159 = arith.constant 0 : index
      %96 = vector.load %arg4[%95, %c0_158, %c0_159] : memref<4x4x256xf32, #tpu.memory_space<vmem>>, vector<1x4x256xf32>
      %97 = vector.shape_cast %96 : vector<1x4x256xf32> to vector<4x256xf32>
      %98 = vector.broadcast %71 : vector<4x1xf32> to vector<4x256xf32>
      %99 = arith.subf %97, %98 : vector<4x256xf32>
      %c0_160 = arith.constant 0 : index
      %c0_161 = arith.constant 0 : index
      %100 = vector.load %arg6[%c0_160, %c0_161] : memref<4x1xf32, #tpu.memory_space<vmem>>, vector<4x1xf32>
      %101 = arith.mulf %99, %99 : vector<4x256xf32>
      %cst_162 = arith.constant dense<0.000000e+00> : vector<4xf32>
      %102 = vector.multi_reduction <add>, %101, %cst_162 [1] : vector<4x256xf32> to vector<4xf32>
      %103 = vector.shape_cast %102 : vector<4xf32> to vector<4x1xf32>
      %104 = arith.addf %100, %103 : vector<4x1xf32>
      %c0_163 = arith.constant 0 : index
      %c0_164 = arith.constant 0 : index
      %105 = vector.load %arg6[%c0_163, %c0_164] : memref<4x1xf32, #tpu.memory_space<vmem>>, vector<4x1xf32>
      tpu.vector_store %arg6[%c0_163, %c0_164], %104 {strides = array<i32>} : memref<4x1xf32, #tpu.memory_space<vmem>>, vector<4x1xf32>,
    }
    %c2_i32_131 = arith.constant 2 : i32
    %c0_132 = arith.constant 0 : index
    %c0_133 = arith.constant 0 : index
    %75 = vector.load %arg6[%c0_132, %c0_133] : memref<4x1xf32, #tpu.memory_space<vmem>>, vector<4x1xf32>
    %cst_134 = arith.constant 0.001953125 : f32
    %76 = vector.broadcast %cst_134 : f32 to vector<4x1xf32>
    %77 = arith.mulf %75, %76 : vector<4x1xf32>
    %c2 = arith.constant 2 : index
    %c0_135 = arith.constant 0 : index
    %c0_136 = arith.constant 0 : index
    %78 = vector.load %arg1[%c2, %c0_135, %c0_136] : memref<3x4x1xf32, #tpu.memory_space<vmem>>, vector<1x4x1xf32>
    %79 = vector.shape_cast %78 : vector<1x4x1xf32> to vector<4x1xf32>
    %cst_137 = arith.constant 9.99999974E-6 : f32
    %80 = vector.broadcast %cst_137 : f32 to vector<4x1xf32>
    %81 = arith.addf %77, %80 : vector<4x1xf32>
    %82 = math.rsqrt %81 : vector<4x1xf32>
    %83 = arith.mulf %79, %82 : vector<4x1xf32>
    %c2_138 = arith.constant 2 : index
    %c0_139 = arith.constant 0 : index
    %c0_140 = arith.constant 0 : index
    %84 = vector.load %arg2[%c2_138, %c0_139, %c0_140] : memref<3x4x1xf32, #tpu.memory_space<vmem>>, vector<1x4x1xf32>
    %85 = vector.shape_cast %84 : vector<1x4x1xf32> to vector<4x1xf32>
    %86 = arith.mulf %71, %83 : vector<4x1xf32>
    %87 = arith.subf %85, %86 : vector<4x1xf32>
    %c0_i32_141 = arith.constant 0 : i32
    %c2_i32_142 = arith.constant 2 : i32
    %88 = arith.addi %c0_i32_141, %c2_i32_142 : i32
    %c1_i32_143 = arith.constant 1 : i32
    scf.for %arg8 = %c0_i32_141 to %88 step %c1_i32_143  : i32 {
      %c1_i32_156 = arith.constant 1 : i32
      %93 = arith.muli %arg8, %c1_i32_156 : i32
      %c0_i32_157 = arith.constant 0 : i32
      %94 = arith.addi %c0_i32_157, %93 : i32
      %95 = arith.index_cast %94 : i32 to index
      %c0_158 = arith.constant 0 : index
      %c0_159 = arith.constant 0 : index
      %96 = vector.load %arg4[%95, %c0_158, %c0_159] : memref<4x4x256xf32, #tpu.memory_space<vmem>>, vector<1x4x256xf32>
      %97 = vector.shape_cast %96 : vector<1x4x256xf32> to vector<4x256xf32>
      %98 = vector.broadcast %83 : vector<4x1xf32> to vector<4x256xf32>
      %99 = arith.mulf %97, %98 : vector<4x256xf32>
      %100 = vector.broadcast %87 : vector<4x1xf32> to vector<4x256xf32>
      %101 = arith.addf %99, %100 : vector<4x256xf32>
      %102 = arith.index_cast %94 : i32 to index
      %c0_160 = arith.constant 0 : index
      %c0_161 = arith.constant 0 : index
      %103 = vector.load %arg4[%102, %c0_160, %c0_161] : memref<4x4x256xf32, #tpu.memory_space<vmem>>, vector<1x4x256xf32>
      %104 = vector.shape_cast %103 : vector<1x4x256xf32> to vector<4x256xf32>
      %105 = vector.shape_cast %101 : vector<4x256xf32> to vector<1x4x256xf32>
      tpu.vector_store %arg4[%102, %c0_160, %c0_161], %105 {strides = array<i32>} : memref<4x4x256xf32, #tpu.memory_space<vmem>>, vector<1x4x256xf32>,
    }
    %c2_i32_144 = arith.constant 2 : i32
    %c0_i32_145 = arith.constant 0 : i32
    %c0_i32_146 = arith.constant 0 : i32
    %c0_i32_147 = arith.constant 0 : i32
    %89 = tpu.memref_slice %arg4[%c0_i32_145, %c0_i32_146, %c0_i32_147] : memref<4x4x256xf32, #tpu.memory_space<vmem>> -> memref<2x4x256xf32, #tpu.memory_space<vmem>>
    %c6_i32 = arith.constant 6 : i32
    %c0_i32_148 = arith.constant 0 : i32
    %c0_i32_149 = arith.constant 0 : i32
    %90 = tpu.memref_slice %arg3[%c6_i32, %c0_i32_148, %c0_i32_149] : memref<8x4x256xf32, #tpu.memory_space<any>> -> memref<2x4x256xf32, #tpu.memory_space<any>>
    tpu.enqueue_dma source(%89 : memref<2x4x256xf32, #tpu.memory_space<vmem>>) target(%90 : memref<2x4x256xf32, #tpu.memory_space<any>>) target_semaphore(%arg7 : memref<!tpu.dma_semaphore, #tpu.memory_space<semaphore_mem>>)
    %c0_i32_150 = arith.constant 0 : i32
    %c0_i32_151 = arith.constant 0 : i32
    %c0_i32_152 = arith.constant 0 : i32
    %91 = tpu.memref_slice %arg4[%c0_i32_150, %c0_i32_151, %c0_i32_152] : memref<4x4x256xf32, #tpu.memory_space<vmem>> -> memref<2x4x256xf32, #tpu.memory_space<vmem>>
    %c6_i32_153 = arith.constant 6 : i32
    %c0_i32_154 = arith.constant 0 : i32
    %c0_i32_155 = arith.constant 0 : i32
    %92 = tpu.memref_slice %arg3[%c6_i32_153, %c0_i32_154, %c0_i32_155] : memref<8x4x256xf32, #tpu.memory_space<any>> -> memref<2x4x256xf32, #tpu.memory_space<any>>
    tpu.wait_dma2 semaphore(%arg7 : memref<!tpu.dma_semaphore, #tpu.memory_space<semaphore_mem>>) src(%91 : memref<2x4x256xf32, #tpu.memory_space<vmem>>) dst(%92 : memref<2x4x256xf32, #tpu.memory_space<any>>)
    return
  }
}

</mosaic_0001>

<llo_original>
// kernel: tpu_custom_call.1
$region0: #{tpu_custom_call.1}
  #allocation0 [shape = 'u32[]', space=smem, size = 0x4, offset = 0x4, fixed_abs, tag = 'smem constant byte address 0x4 - core index']
  #allocation1 [shape = 'u32[144,128]{1,0:T(1,128)}', space=vmem, size = 0x12000, scoped, tag = 'internal scratch']
  #allocation2 [shape = 'f32[4,4,256]{2,1,0:T(4,128)}', space=vmem, size = 0x4000, scoped, tag = 'scratch operand']
  #allocation3 [shape = 'f32[4,1]{1,0:T(4,128)}', space=vmem, size = 0x800, scoped, tag = 'scratch operand']
  #allocation4 [shape = 'f32[4,1]{1,0:T(4,128)}', space=vmem, size = 0x800, scoped, tag = 'scratch operand']
  #allocation5 [shape = 's32[1]{0}', space=sflag, size = 0x4, scoped, tag = 'scratch operand']
  #allocation6 [shape = 's32[]', space=sflag, size = 0x4, offset = 0, fixed_abs, tag = 'sflag constant byte address 0x0 - dummy sync flag']
  #allocation7 [shape = 's32[]', space=sflag, size = 0x4, offset = 0, fixed_abs, tag = 'sflag constant byte address 0x0 - dummy sync flag']
  #allocation8 [shape = 'u32[]', space=smem, size = 0x4, offset = 0x44, fixed_abs, tag = 'smem constant byte address 0x44 - assertion arg 0']
  #allocation9 [shape = 'u32[]', space=smem, size = 0x4, offset = 0x48, fixed_abs, tag = 'smem constant byte address 0x48 - assertion arg 1']
  #allocation10 [shape = 's32[]', space=sflag, size = 0x4, offset = 0, fixed_abs, tag = 'sflag constant byte address 0x0 - dummy sync flag']
  #allocation11 [shape = 's32[]', space=sflag, size = 0x4, offset = 0, fixed_abs, tag = 'sflag constant byte address 0x0 - dummy sync flag']
  #allocation12 [shape = 's32[]', space=sflag, size = 0x4, offset = 0, fixed_abs, tag = 'sflag constant byte address 0x0 - dummy sync flag']
  #allocation13 [shape = 's32[]', space=sflag, size = 0x4, offset = 0, fixed_abs, tag = 'sflag constant byte address 0x0 - dummy sync flag']
  #allocation14 [shape = 's32[]', space=sflag, size = 0x4, offset = 0, fixed_abs, tag = 'sflag constant byte address 0x0 - dummy sync flag']
  #allocation15 [shape = 's32[]', space=sflag, size = 0x4, offset = 0, fixed_abs, tag = 'sflag constant byte address 0x0 - dummy sync flag']
  #allocation16 [shape = 's32[]', space=sflag, size = 0x4, offset = 0, fixed_abs, tag = 'sflag constant byte address 0x0 - dummy sync flag']
  #allocation17 [shape = 's32[]', space=sflag, size = 0x4, offset = 0, fixed_abs, tag = 'sflag constant byte address 0x0 - dummy sync flag']
  #allocation18 [shape = 's32[]', space=sflag, size = 0x4, offset = 0, fixed_abs, tag = 'sflag constant byte address 0x0 - dummy sync flag']
  #allocation19 [shape = 's32[]', space=sflag, size = 0x4, offset = 0, fixed_abs, tag = 'sflag constant byte address 0x0 - dummy sync flag']
  %s0 = inlined_call_operand.hbm [shape: f32[8,4,256], index: 0, kind: input, shape index: {}]
  %s1 = inlined_call_operand.vmem [shape: f32[3,4,1], index: 1, kind: input, shape index: {}]
  %s2 = inlined_call_operand.vmem [shape: f32[3,4,1], index: 2, kind: input, shape index: {}]
  %s3 = inlined_call_operand.hbm [shape: f32[8,4,256], index: 3, kind: output, shape index: {}]
  %s4 = sld [smem:[#allocation0]]
  $region97: #{tpu_custom_call.1} parent=0
    _
  %s6 = ssub.s32 1, %s4
  %s7 = scalar_select 0, %s6, %s4
  // Predicated region
  $region2: #{tpu_custom_call.1} parent=0 // pred_check
    _
  $region3: #{tpu_custom_call.1} parent=0 // pred_check_branch
    %9 = sbr.rel (0) target = $region5
  $region4: #{tpu_custom_call.1} parent=0 // pred_region
    _
  $region5: #{tpu_custom_call.1} parent=0 // pred_fallthru
    _
  // Predicated region
  $region6: #{tpu_custom_call.1} parent=0 // pred_check
    _
  $region7: #{tpu_custom_call.1} parent=0 // pred_check_branch
    %11 = sbr.rel (0) target = $region9
  $region8: #{tpu_custom_call.1} parent=0 // pred_region
    _
  $region9: #{tpu_custom_call.1} parent=0 // pred_fallthru
    _
  // Predicated region
  $region10: #{tpu_custom_call.1} parent=0 // pred_check
    _
  $region11: #{tpu_custom_call.1} parent=0 // pred_check_branch
    %13 = sbr.rel target = $region13
  $region12: #{tpu_custom_call.1} parent=0 // pred_region
    %14 = sst [smem:[#allocation8]] [#allocation7]
    %15 = sst [smem:[#allocation9]] [#allocation6]
  $region13: #{tpu_custom_call.1} parent=0 // pred_fallthru
    _
  %17 = shalt.err (0)
  %s19 = sshll.u32 [#allocation2], 4
  %s20 = int_to_ptr.vmem [resolvable:$true] %s19
  %22 = dma.hbm_to_vmem [thread:$0]  %s0, 512, %s20, [#allocation5]
  %s23 = smul.u32 4, 4
  %s24 = smul.u32 %s23, 1
  %s25 = smul.u32 %s24, 2
  %s26 = sshll.u32 %s25, 4
  %27 = dma.done [#allocation5], %s26
  %vm28 = vcmask 3072
  %29 = vst.msk [vmem:[#allocation3] sm:$0xf] %vm28, 0.0
  loop: start=0, step=1, limit=4
  $region14: #{tpu_custom_call.1} parent=0 // loop_pre_header
    _
  $region15: #{tpu_custom_call.1} parent=0 // loop_header
    %s31 = sphi 0, %s35
    %p32 = scmp.ge.s32.totalorder %s31, 4
  $region16: #{tpu_custom_call.1} parent=0 // loop_header_branch
    %34 = sbr.rel (%p32) target = $region20
  $region17: #{tpu_custom_call.1} parent=0 // loop_body
    %s36 = smul.u32 %s31, 2
    %s37 = smul.addr %s36, 4
    %s38 = scalar_lea.vmem [#allocation2], %s37
    %v39 = vld [vmem:[%s38] sm:$0xff]
    %v40 = vld [vmem:[#allocation3] sm:$0xf]
    %v42 = vcombine.high %v39, %v39
    %vm44 = vcmask 1043456
    %v45 = vsel %vm44, %v39, 0.0
    %v46 = vsel %vm44, %v42, 0.0
    %v47 = vadd.f32 %v45, %v46
    %48 = vadd.xlane.f32.xlu0 %v47
    %v49 = vpop.xlane.xlu0 %48
    %v50 = vadd.f32 %v40, %v49
    %51 = vst.msk [vmem:[#allocation3] sm:$0xf] %vm28, %v50
  $region18: #{tpu_custom_call.1} parent=0 // loop_footer
    %s35 = sadd.s32 1, %s31
  $region19: #{tpu_custom_call.1} parent=0 // loop_footer_branch
    %30 = sbr.rel target = $region15
  $region20: #{tpu_custom_call.1} parent=0 // loop_exit
    _
  %v52 = vld [vmem:[#allocation3] sm:$0xf]
  %v53 = vmul.f32 %v52, 0.0009765625
  %54 = vst.msk [vmem:[#allocation4] sm:$0xf] %vm28, 0.0
  loop: start=0, step=1, limit=4
  $region21: #{tpu_custom_call.1} parent=0 // loop_pre_header
    _
  $region22: #{tpu_custom_call.1} parent=0 // loop_header
    %s56 = sphi 0, %s60
    %p57 = scmp.ge.s32.totalorder %s56, 4
  $region23: #{tpu_custom_call.1} parent=0 // loop_header_branch
    %59 = sbr.rel (%p57) target = $region27
  $region24: #{tpu_custom_call.1} parent=0 // loop_body
    %s61 = smul.u32 %s56, 2
    %s62 = smul.addr %s61, 4
    %s63 = scalar_lea.vmem [#allocation2], %s62
    %v64 = vld [vmem:[%s63] sm:$0xff]
    %66 = vset.pattern.permute.xlu0 0
    %67 = vperm.xlu0 %66, %v53
    %v68 = vpop.permute.xlu0 %67
    %v70 = vunpack.c.l.s4 839922192
    %v71 = vunpack.c.0.s8 %v70
    %v72 = vlaneseq
    %v73 = vshrl.u32 %v72, 7
    %v74 = vsub.s32 %v71, %v73
    %v75 = vrot.slane %v68, %v74
    %v77 = vsub.f32 %v64, %v75
    %v78 = vld [vmem:[#allocation4] sm:$0xf]
    %v79 = vmul.f32 %v77, %v77
    %v81 = vcombine.high %v79, %v79
    %vm83 = vcmask 1043456
    %v84 = vsel %vm83, %v79, 0.0
    %v85 = vsel %vm83, %v81, 0.0
    %v86 = vadd.f32 %v84, %v85
    %87 = vadd.xlane.f32.xlu0 %v86
    %v88 = vpop.xlane.xlu0 %87
    %v89 = vadd.f32 %v78, %v88
    %90 = vst.msk [vmem:[#allocation4] sm:$0xf] %vm28, %v89
  $region25: #{tpu_custom_call.1} parent=0 // loop_footer
    %s60 = sadd.s32 1, %s56
  $region26: #{tpu_custom_call.1} parent=0 // loop_footer_branch
    %55 = sbr.rel target = $region22
  $region27: #{tpu_custom_call.1} parent=0 // loop_exit
    _
  %v91 = vld [vmem:[#allocation4] sm:$0xf]
  %v92 = vmul.f32 %v91, 0.0009765625
  %v93 = vld [vmem:[%s1] sm:$0xf]
  %v94 = vadd.f32 %v92, 1e-05
  %v95 = vrsqrt.pop %v94
  %v96 = vmul.f32 %v93, %v95
  %v97 = vld [vmem:[%s2] sm:$0xf]
  %v98 = vmul.f32 %v53, %v96
  %v99 = vsub.f32 %v97, %v98
  loop: start=0, step=1, limit=4
  $region28: #{tpu_custom_call.1} parent=0 // loop_pre_header
    _
  $region29: #{tpu_custom_call.1} parent=0 // loop_header
    %s101 = sphi 0, %s105
    %p102 = scmp.ge.s32.totalorder %s101, 4
  $region30: #{tpu_custom_call.1} parent=0 // loop_header_branch
    %104 = sbr.rel (%p102) target = $region34
  $region31: #{tpu_custom_call.1} parent=0 // loop_body
    %s106 = smul.u32 %s101, 2
    %s107 = smul.addr %s106, 4
    %s108 = scalar_lea.vmem [#allocation2], %s107
    %v109 = vld [vmem:[%s108] sm:$0xff]
    %111 = vset.pattern.permute.xlu0 0
    %112 = vperm.xlu0 %111, %v96
    %v113 = vpop.permute.xlu0 %112
    %v115 = vunpack.c.l.s4 839922192
    %v116 = vunpack.c.0.s8 %v115
    %v117 = vlaneseq
    %v118 = vshrl.u32 %v117, 7
    %v119 = vsub.s32 %v116, %v118
    %v120 = vrot.slane %v113, %v119
    %v122 = vmul.f32 %v109, %v120
    %124 = vset.pattern.permute.xlu0 0
    %125 = vperm.xlu0 %124, %v99
    %v126 = vpop.permute.xlu0 %125
    %v128 = vunpack.c.l.s4 839922192
    %v129 = vunpack.c.0.s8 %v128
    %v130 = vlaneseq
    %v131 = vshrl.u32 %v130, 7
    %v132 = vsub.s32 %v129, %v131
    %v133 = vrot.slane %v126, %v132
    %v135 = vadd.f32 %v122, %v133
    %136 = vst [vmem:[%s108] sm:$0xff] %v135
  $region32: #{tpu_custom_call.1} parent=0 // loop_footer
    %s105 = sadd.s32 1, %s101
  $region33: #{tpu_custom_call.1} parent=0 // loop_footer_branch
    %100 = sbr.rel target = $region29
  $region34: #{tpu_custom_call.1} parent=0 // loop_exit
    _
  // Predicated region
  $region35: #{tpu_custom_call.1} parent=0 // pred_check
    _
  $region36: #{tpu_custom_call.1} parent=0 // pred_check_branch
    %138 = sbr.rel target = $region38
  $region37: #{tpu_custom_call.1} parent=0 // pred_region
    %139 = sst [smem:[#allocation8]] [#allocation11]
    %140 = sst [smem:[#allocation9]] [#allocation10]
  $region38: #{tpu_custom_call.1} parent=0 // pred_fallthru
    _
  %142 = shalt.err (0)
  %s144 = sshll.u32 [#allocation2], 4
  %s145 = int_to_ptr.vmem [resolvable:$true] %s144
  %147 = dma.vmem_to_hbm [thread:$0]  %s145, 512, %s3, [#allocation5]
  %s148 = sshll.u32 %s25, 4
  %149 = dma.done [#allocation5], %s148
  %s150 = scalar_lea.hbm %s0, 128
  // Predicated region
  $region39: #{tpu_custom_call.1} parent=0 // pred_check
    _
  $region40: #{tpu_custom_call.1} parent=0 // pred_check_branch
    %152 = sbr.rel target = $region42
  $region41: #{tpu_custom_call.1} parent=0 // pred_region
    %153 = sst [smem:[#allocation8]] [#allocation13]
    %154 = sst [smem:[#allocation9]] [#allocation12]
  $region42: #{tpu_custom_call.1} parent=0 // pred_fallthru
    _
  %156 = shalt.err (0)
  %s158 = sshll.u32 [#allocation2], 4
  %s159 = int_to_ptr.vmem [resolvable:$true] %s158
  %161 = dma.hbm_to_vmem [thread:$0]  %s150, 256, %s159, [#allocation5]
  %s162 = smul.u32 4, 2
  %s163 = smul.u32 %s162, 1
  %s164 = smul.u32 %s163, 2
  %s165 = sshll.u32 %s164, 4
  %166 = dma.done [#allocation5], %s165
  %167 = vst.msk [vmem:[#allocation3] sm:$0xf] %vm28, 0.0
  loop: start=0, step=1, limit=2
  $region43: #{tpu_custom_call.1} parent=0 // loop_pre_header
    _
  $region44: #{tpu_custom_call.1} parent=0 // loop_header
    %s169 = sphi 0, %s173
    %p170 = scmp.ge.s32.totalorder %s169, 2
  $region45: #{tpu_custom_call.1} parent=0 // loop_header_branch
    %172 = sbr.rel (%p170) target = $region49
  $region46: #{tpu_custom_call.1} parent=0 // loop_body
    %s174 = smul.u32 %s169, 2
    %s175 = smul.addr %s174, 4
    %s176 = scalar_lea.vmem [#allocation2], %s175
    %v177 = vld [vmem:[%s176] sm:$0xff]
    %v178 = vld [vmem:[#allocation3] sm:$0xf]
    %v180 = vcombine.high %v177, %v177
    %vm182 = vcmask 1043456
    %v183 = vsel %vm182, %v177, 0.0
    %v184 = vsel %vm182, %v180, 0.0
    %v185 = vadd.f32 %v183, %v184
    %186 = vadd.xlane.f32.xlu0 %v185
    %v187 = vpop.xlane.xlu0 %186
    %v188 = vadd.f32 %v178, %v187
    %189 = vst.msk [vmem:[#allocation3] sm:$0xf] %vm28, %v188
  $region47: #{tpu_custom_call.1} parent=0 // loop_footer
    %s173 = sadd.s32 1, %s169
  $region48: #{tpu_custom_call.1} parent=0 // loop_footer_branch
    %168 = sbr.rel target = $region44
  $region49: #{tpu_custom_call.1} parent=0 // loop_exit
    _
  %v190 = vld [vmem:[#allocation3] sm:$0xf]
  %v191 = vmul.f32 %v190, 0.001953125
  %192 = vst.msk [vmem:[#allocation4] sm:$0xf] %vm28, 0.0
  loop: start=0, step=1, limit=2
  $region50: #{tpu_custom_call.1} parent=0 // loop_pre_header
    _
  $region51: #{tpu_custom_call.1} parent=0 // loop_header
    %s194 = sphi 0, %s198
    %p195 = scmp.ge.s32.totalorder %s194, 2
  $region52: #{tpu_custom_call.1} parent=0 // loop_header_branch
    %197 = sbr.rel (%p195) target = $region56
  $region53: #{tpu_custom_call.1} parent=0 // loop_body
    %s199 = smul.u32 %s194, 2
    %s200 = smul.addr %s199, 4
    %s201 = scalar_lea.vmem [#allocation2], %s200
    %v202 = vld [vmem:[%s201] sm:$0xff]
    %204 = vset.pattern.permute.xlu0 0
    %205 = vperm.xlu0 %204, %v191
    %v206 = vpop.permute.xlu0 %205
    %v208 = vunpack.c.l.s4 839922192
    %v209 = vunpack.c.0.s8 %v208
    %v210 = vlaneseq
    %v211 = vshrl.u32 %v210, 7
    %v212 = vsub.s32 %v209, %v211
    %v213 = vrot.slane %v206, %v212
    %v215 = vsub.f32 %v202, %v213
    %v216 = vld [vmem:[#allocation4] sm:$0xf]
    %v217 = vmul.f32 %v215, %v215
    %v219 = vcombine.high %v217, %v217
    %vm221 = vcmask 1043456
    %v222 = vsel %vm221, %v217, 0.0
    %v223 = vsel %vm221, %v219, 0.0
    %v224 = vadd.f32 %v222, %v223
    %225 = vadd.xlane.f32.xlu0 %v224
    %v226 = vpop.xlane.xlu0 %225
    %v227 = vadd.f32 %v216, %v226
    %228 = vst.msk [vmem:[#allocation4] sm:$0xf] %vm28, %v227
  $region54: #{tpu_custom_call.1} parent=0 // loop_footer
    %s198 = sadd.s32 1, %s194
  $region55: #{tpu_custom_call.1} parent=0 // loop_footer_branch
    %193 = sbr.rel target = $region51
  $region56: #{tpu_custom_call.1} parent=0 // loop_exit
    _
  %v229 = vld [vmem:[#allocation4] sm:$0xf]
  %v230 = vmul.f32 %v229, 0.001953125
  %s231 = scalar_lea.vmem %s1, 4
  %v232 = vld [vmem:[%s231] sm:$0xf]
  %v233 = vadd.f32 %v230, 1e-05
  %v234 = vrsqrt.pop %v233
  %v235 = vmul.f32 %v232, %v234
  %s236 = scalar_lea.vmem %s2, 4
  %v237 = vld [vmem:[%s236] sm:$0xf]
  %v238 = vmul.f32 %v191, %v235
  %v239 = vsub.f32 %v237, %v238
  loop: start=0, step=1, limit=2
  $region57: #{tpu_custom_call.1} parent=0 // loop_pre_header
    _
  $region58: #{tpu_custom_call.1} parent=0 // loop_header
    %s241 = sphi 0, %s245
    %p242 = scmp.ge.s32.totalorder %s241, 2
  $region59: #{tpu_custom_call.1} parent=0 // loop_header_branch
    %244 = sbr.rel (%p242) target = $region63
  $region60: #{tpu_custom_call.1} parent=0 // loop_body
    %s246 = smul.u32 %s241, 2
    %s247 = smul.addr %s246, 4
    %s248 = scalar_lea.vmem [#allocation2], %s247
    %v249 = vld [vmem:[%s248] sm:$0xff]
    %251 = vset.pattern.permute.xlu0 0
    %252 = vperm.xlu0 %251, %v235
    %v253 = vpop.permute.xlu0 %252
    %v255 = vunpack.c.l.s4 839922192
    %v256 = vunpack.c.0.s8 %v255
    %v257 = vlaneseq
    %v258 = vshrl.u32 %v257, 7
    %v259 = vsub.s32 %v256, %v258
    %v260 = vrot.slane %v253, %v259
    %v262 = vmul.f32 %v249, %v260
    %264 = vset.pattern.permute.xlu0 0
    %265 = vperm.xlu0 %264, %v239
    %v266 = vpop.permute.xlu0 %265
    %v268 = vunpack.c.l.s4 839922192
    %v269 = vunpack.c.0.s8 %v268
    %v270 = vlaneseq
    %v271 = vshrl.u32 %v270, 7
    %v272 = vsub.s32 %v269, %v271
    %v273 = vrot.slane %v266, %v272
    %v275 = vadd.f32 %v262, %v273
    %276 = vst [vmem:[%s248] sm:$0xff] %v275
  $region61: #{tpu_custom_call.1} parent=0 // loop_footer
    %s245 = sadd.s32 1, %s241
  $region62: #{tpu_custom_call.1} parent=0 // loop_footer_branch
    %240 = sbr.rel target = $region58
  $region63: #{tpu_custom_call.1} parent=0 // loop_exit
    _
  %s277 = scalar_lea.hbm %s3, 512
  // Predicated region
  $region64: #{tpu_custom_call.1} parent=0 // pred_check
    _
  $region65: #{tpu_custom_call.1} parent=0 // pred_check_branch
    %279 = sbr.rel target = $region67
  $region66: #{tpu_custom_call.1} parent=0 // pred_region
    %280 = sst [smem:[#allocation8]] [#allocation15]
    %281 = sst [smem:[#allocation9]] [#allocation14]
  $region67: #{tpu_custom_call.1} parent=0 // pred_fallthru
    _
  %283 = shalt.err (0)
  %s285 = sshll.u32 [#allocation2], 4
  %s286 = int_to_ptr.vmem [resolvable:$true] %s285
  %288 = dma.vmem_to_hbm [thread:$0]  %s286, 256, %s277, [#allocation5]
  %s289 = sshll.u32 %s164, 4
  %290 = dma.done [#allocation5], %s289
  %s291 = scalar_lea.hbm %s0, 256
  // Predicated region
  $region68: #{tpu_custom_call.1} parent=0 // pred_check
    _
  $region69: #{tpu_custom_call.1} parent=0 // pred_check_branch
    %293 = sbr.rel target = $region71
  $region70: #{tpu_custom_call.1} parent=0 // pred_region
    %294 = sst [smem:[#allocation8]] [#allocation17]
    %295 = sst [smem:[#allocation9]] [#allocation16]
  $region71: #{tpu_custom_call.1} parent=0 // pred_fallthru
    _
  %297 = shalt.err (0)
  %s299 = sshll.u32 [#allocation2], 4
  %s300 = int_to_ptr.vmem [resolvable:$true] %s299
  %302 = dma.hbm_to_vmem [thread:$0]  %s291, 256, %s300, [#allocation5]
  %s303 = sshll.u32 %s164, 4
  %304 = dma.done [#allocation5], %s303
  %305 = vst.msk [vmem:[#allocation3] sm:$0xf] %vm28, 0.0
  loop: start=0, step=1, limit=2
  $region72: #{tpu_custom_call.1} parent=0 // loop_pre_header
    _
  $region73: #{tpu_custom_call.1} parent=0 // loop_header
    %s307 = sphi 0, %s311
    %p308 = scmp.ge.s32.totalorder %s307, 2
  $region74: #{tpu_custom_call.1} parent=0 // loop_header_branch
    %310 = sbr.rel (%p308) target = $region78
  $region75: #{tpu_custom_call.1} parent=0 // loop_body
    %s312 = smul.u32 %s307, 2
    %s313 = smul.addr %s312, 4
    %s314 = scalar_lea.vmem [#allocation2], %s313
    %v315 = vld [vmem:[%s314] sm:$0xff]
    %v316 = vld [vmem:[#allocation3] sm:$0xf]
    %v318 = vcombine.high %v315, %v315
    %vm320 = vcmask 1043456
    %v321 = vsel %vm320, %v315, 0.0
    %v322 = vsel %vm320, %v318, 0.0
    %v323 = vadd.f32 %v321, %v322
    %324 = vadd.xlane.f32.xlu0 %v323
    %v325 = vpop.xlane.xlu0 %324
    %v326 = vadd.f32 %v316, %v325
    %327 = vst.msk [vmem:[#allocation3] sm:$0xf] %vm28, %v326
  $region76: #{tpu_custom_call.1} parent=0 // loop_footer
    %s311 = sadd.s32 1, %s307
  $region77: #{tpu_custom_call.1} parent=0 // loop_footer_branch
    %306 = sbr.rel target = $region73
  $region78: #{tpu_custom_call.1} parent=0 // loop_exit
    _
  %v328 = vld [vmem:[#allocation3] sm:$0xf]
  %v329 = vmul.f32 %v328, 0.001953125
  %330 = vst.msk [vmem:[#allocation4] sm:$0xf] %vm28, 0.0
  loop: start=0, step=1, limit=2
  $region79: #{tpu_custom_call.1} parent=0 // loop_pre_header
    _
  $region80: #{tpu_custom_call.1} parent=0 // loop_header
    %s332 = sphi 0, %s336
    %p333 = scmp.ge.s32.totalorder %s332, 2
  $region81: #{tpu_custom_call.1} parent=0 // loop_header_branch
    %335 = sbr.rel (%p333) target = $region85
  $region82: #{tpu_custom_call.1} parent=0 // loop_body
    %s337 = smul.u32 %s332, 2
    %s338 = smul.addr %s337, 4
    %s339 = scalar_lea.vmem [#allocation2], %s338
    %v340 = vld [vmem:[%s339] sm:$0xff]
    %342 = vset.pattern.permute.xlu0 0
    %343 = vperm.xlu0 %342, %v329
    %v344 = vpop.permute.xlu0 %343
    %v346 = vunpack.c.l.s4 839922192
    %v347 = vunpack.c.0.s8 %v346
    %v348 = vlaneseq
    %v349 = vshrl.u32 %v348, 7
    %v350 = vsub.s32 %v347, %v349
    %v351 = vrot.slane %v344, %v350
    %v353 = vsub.f32 %v340, %v351
    %v354 = vld [vmem:[#allocation4] sm:$0xf]
    %v355 = vmul.f32 %v353, %v353
    %v357 = vcombine.high %v355, %v355
    %vm359 = vcmask 1043456
    %v360 = vsel %vm359, %v355, 0.0
    %v361 = vsel %vm359, %v357, 0.0
    %v362 = vadd.f32 %v360, %v361
    %363 = vadd.xlane.f32.xlu0 %v362
    %v364 = vpop.xlane.xlu0 %363
    %v365 = vadd.f32 %v354, %v364
    %366 = vst.msk [vmem:[#allocation4] sm:$0xf] %vm28, %v365
  $region83: #{tpu_custom_call.1} parent=0 // loop_footer
    %s336 = sadd.s32 1, %s332
  $region84: #{tpu_custom_call.1} parent=0 // loop_footer_branch
    %331 = sbr.rel target = $region80
  $region85: #{tpu_custom_call.1} parent=0 // loop_exit
    _
  %v367 = vld [vmem:[#allocation4] sm:$0xf]
  %v368 = vmul.f32 %v367, 0.001953125
  %s369 = scalar_lea.vmem %s1, 8
  %v370 = vld [vmem:[%s369] sm:$0xf]
  %v371 = vadd.f32 %v368, 1e-05
  %v372 = vrsqrt.pop %v371
  %v373 = vmul.f32 %v370, %v372
  %s374 = scalar_lea.vmem %s2, 8
  %v375 = vld [vmem:[%s374] sm:$0xf]
  %v376 = vmul.f32 %v329, %v373
  %v377 = vsub.f32 %v375, %v376
  loop: start=0, step=1, limit=2
  $region86: #{tpu_custom_call.1} parent=0 // loop_pre_header
    _
  $region87: #{tpu_custom_call.1} parent=0 // loop_header
    %s379 = sphi 0, %s383
    %p380 = scmp.ge.s32.totalorder %s379, 2
  $region88: #{tpu_custom_call.1} parent=0 // loop_header_branch
    %382 = sbr.rel (%p380) target = $region92
  $region89: #{tpu_custom_call.1} parent=0 // loop_body
    %s384 = smul.u32 %s379, 2
    %s385 = smul.addr %s384, 4
    %s386 = scalar_lea.vmem [#allocation2], %s385
    %v387 = vld [vmem:[%s386] sm:$0xff]
    %389 = vset.pattern.permute.xlu0 0
    %390 = vperm.xlu0 %389, %v373
    %v391 = vpop.permute.xlu0 %390
    %v393 = vunpack.c.l.s4 839922192
    %v394 = vunpack.c.0.s8 %v393
    %v395 = vlaneseq
    %v396 = vshrl.u32 %v395, 7
    %v397 = vsub.s32 %v394, %v396
    %v398 = vrot.slane %v391, %v397
    %v400 = vmul.f32 %v387, %v398
    %402 = vset.pattern.permute.xlu0 0
    %403 = vperm.xlu0 %402, %v377
    %v404 = vpop.permute.xlu0 %403
    %v406 = vunpack.c.l.s4 839922192
    %v407 = vunpack.c.0.s8 %v406
    %v408 = vlaneseq
    %v409 = vshrl.u32 %v408, 7
    %v410 = vsub.s32 %v407, %v409
    %v411 = vrot.slane %v404, %v410
    %v413 = vadd.f32 %v400, %v411
    %414 = vst [vmem:[%s386] sm:$0xff] %v413
  $region90: #{tpu_custom_call.1} parent=0 // loop_footer
    %s383 = sadd.s32 1, %s379
  $region91: #{tpu_custom_call.1} parent=0 // loop_footer_branch
    %378 = sbr.rel target = $region87
  $region92: #{tpu_custom_call.1} parent=0 // loop_exit
    _
  %s415 = scalar_lea.hbm %s3, 768
  // Predicated region
  $region93: #{tpu_custom_call.1} parent=0 // pred_check
    _
  $region94: #{tpu_custom_call.1} parent=0 // pred_check_branch
    %417 = sbr.rel target = $region96
  $region95: #{tpu_custom_call.1} parent=0 // pred_region
    %418 = sst [smem:[#allocation8]] [#allocation19]
    %419 = sst [smem:[#allocation9]] [#allocation18]
  $region96: #{tpu_custom_call.1} parent=0 // pred_fallthru
    _
  %421 = shalt.err (0)
  %s423 = sshll.u32 [#allocation2], 4
  %s424 = int_to_ptr.vmem [resolvable:$true] %s423
  %426 = dma.vmem_to_hbm [thread:$0]  %s424, 256, %s415, [#allocation5]
  %s427 = sshll.u32 %s164, 4
  %428 = dma.done [#allocation5], %s427
  %429 = vsyncmov [#allocation5]
  %s430 = vpop.sfrf %429
  %p431 = scmp.eq.s32.totalorder %s430, 0
  %p432 = pneg %p431
  %434 = shalt.err (%p432)

</llo_original>
